<compile_context>
chip_gen: v5e
topology: v5e:2x2
jax: 0.10.0
libtpu: 0.0.40
codegen_flags: <defaults>
</compile_context>

<pallas_src>
import jax
import jax.numpy as jnp
from jax.experimental import pallas as pl
from jax.experimental.pallas import tpu as pltpu


def _round_up(x, m):
    return ((x + m - 1) // m) * m


def _num_tensorcores_per_chip():
    """2 on megacore chips (v7x, v4); 1 on v5e/v6e. Tiling hint only."""
    try:
        kind = jax.devices()[0].device_kind.lower()
    except Exception:
        return 1
    return 2 if ("v7" in kind or "v4" in kind) else 1


# --------------------------------------------------------------------------- #
# Kernel
# --------------------------------------------------------------------------- #
def _zencoder_kernel(x_ref, wm_ref, bm_ref, wv_ref, bv_ref, mean_ref, var_ref):
    # x_ref:  (tb, r_dim)   input batch tile
    # w*_ref: (r_dim, z_dim) resident weights;  b*_ref: (1, z_dim) f32 biases
    # mean_ref / var_ref: (tb, z_dim) unpadded output tiles
    x = x_ref[...]
    mean = jnp.dot(x, wm_ref[...], preferred_element_type=jnp.float32) + bm_ref[...]
    var = jnp.dot(x, wv_ref[...], preferred_element_type=jnp.float32) + bv_ref[...]
    mean_ref[...] = mean.astype(mean_ref.dtype)
    var_ref[...] = var.astype(var_ref.dtype)


# --------------------------------------------------------------------------- #
# Parameter prep (hoisted out of the per-call hot path)
# --------------------------------------------------------------------------- #
def prepare_zencoder_params(w_m, b_m, w_v, b_v, *, compute_dtype=None):
    """Do all per-call-invariant parameter work once.

    w_m, w_v: [r_dim, z_dim] (i.e. torch Linear.weight.T); b_m, b_v: [z_dim].
    compute_dtype: e.g. jnp.bfloat16 (recommended on v6e/v7x) halves HBM read
    traffic for x / weights; biases and accumulation stay f32.
    """
    cast = (lambda w: w.astype(compute_dtype)) if compute_dtype is not None else (lambda w: w)
    return {
        "w_m": cast(w_m),
        "w_v": cast(w_v),
        "b_m": jnp.asarray(b_m, jnp.float32).reshape(1, -1),
        "b_v": jnp.asarray(b_v, jnp.float32).reshape(1, -1),
    }


# --------------------------------------------------------------------------- #
# Batch-tile selection
# --------------------------------------------------------------------------- #
def _choose_tb(B8, cap, num_tc):
    """Pick a batch tile (multiple of 8). Returns (tb, needs_padded_grid)."""
    target = max(8, (min(cap, B8) // 8) * 8)
    if num_tc >= 2 and B8 >= 512:
        # Force >=2 grid steps so the "parallel" batch axis shards across both
        # TensorCores (v7x only). Single-TC chips keep one big tile.
        target = min(target, _round_up(pl.cdiv(B8, 2), 8))
    best_any, best_even = 0, 0
    t = 8
    while t <= target:
        if B8 % t == 0:
            best_any = t
            if (B8 // t) % 2 == 0:
                best_even = t
        t += 8
    multi_step = best_any < B8
    best = best_even if (num_tc >= 2 and multi_step and best_even) else best_any
    if best == 0 or (B8 // best) > 4 * pl.cdiv(B8, target):
        # Pathological batch (no decent divisor): fall back to a padded grid.
        return target, True
    return best, False


# --------------------------------------------------------------------------- #
# Forward
# --------------------------------------------------------------------------- #
def np_z_encoder_apply(x, params, *, tb=None, out_dtype=None):
    """NP_ZEncoder forward. x: [B, r_dim]. Returns (mean, var_temp), each [B, z_dim]."""
    w_m, w_v, b_m, b_v = params["w_m"], params["w_v"], params["b_m"], params["b_v"]
    B, r_dim = x.shape
    assert w_m.shape[0] == r_dim and w_v.shape[0] == r_dim
    z_dim = w_m.shape[1]
    if out_dtype is None:
        out_dtype = x.dtype

    # Keep kernel dtypes uniform: if weights were prepared in a narrower compute
    # dtype (bf16), cast x to it. (For full HBM benefit the producer should
    # already emit x in that dtype; this cast is a fallback.)
    if x.dtype != w_m.dtype:
        x = x.astype(w_m.dtype)

    in_item = jnp.dtype(x.dtype).itemsize
    out_item = jnp.dtype(out_dtype).itemsize
    w_item = jnp.dtype(w_m.dtype).itemsize

    B8 = _round_up(B, 8)
    if tb is None:
        # Double-buffered x tile + both output tiles must fit a conservative
        # VMEM budget (v7x: 64 MiB physical / 32 MiB default scoped; resident
        # weights are negligible). Per-step overhead ~0.35us => few, big steps.
        per_row = 2 * (r_dim * in_item + 2 * z_dim * out_item)
        cap = max(8, min(4096, (24 * 1024 * 1024 // per_row) // 8 * 8))
        tb, _ = _choose_tb(B8, cap, _num_tensorcores_per_chip())
    tb = max(8, _round_up(tb, 8))

    B_pad = _round_up(B8, tb)
    x_in = x if B_pad == B else jnp.pad(x, ((0, B_pad - B), (0, 0)))
    grid = (B_pad // tb,)

    cost = pl.CostEstimate(
        flops=4 * B_pad * r_dim * z_dim,
        transcendentals=0,
        bytes_accessed=(B_pad * r_dim * in_item
                        + 2 * r_dim * z_dim * w_item
                        + 2 * z_dim * 4
                        + 2 * B_pad * z_dim * out_item),
    )

    mean, var = pl.pallas_call(
        _zencoder_kernel,
        out_shape=(jax.ShapeDtypeStruct((B_pad, z_dim), out_dtype),
                   jax.ShapeDtypeStruct((B_pad, z_dim), out_dtype)),
        grid_spec=pltpu.PrefetchScalarGridSpec(
            num_scalar_prefetch=0,
            grid=grid,
            in_specs=[
                pl.BlockSpec((tb, r_dim), lambda i: (i, 0)),      # x batch tile
                pl.BlockSpec((r_dim, z_dim), lambda i: (0, 0)),   # W_m (resident)
                pl.BlockSpec((1, z_dim), lambda i: (0, 0)),       # b_m (resident)
                pl.BlockSpec((r_dim, z_dim), lambda i: (0, 0)),   # W_v (resident)
                pl.BlockSpec((1, z_dim), lambda i: (0, 0)),       # b_v (resident)
            ],
            out_specs=[
                pl.BlockSpec((tb, z_dim), lambda i: (i, 0)),      # mean (unpadded)
                pl.BlockSpec((tb, z_dim), lambda i: (i, 0)),      # var_temp (unpadded)
            ],
        ),
        compiler_params=pltpu.CompilerParams(
            dimension_semantics=("parallel",),
        ),
        cost_estimate=cost,
    )(x_in, w_m, b_m, w_v, b_v)

    if B_pad != B:
        mean, var = mean[:B], var[:B]
    return mean, var


def np_z_encoder(x, w_m, b_m, w_v, b_v, *, compute_dtype=None, tb=None, out_dtype=None):
    """Convenience wrapper (fuses param prep per call). For hot loops, call
    prepare_zencoder_params once and use np_z_encoder_apply."""
    params = prepare_zencoder_params(w_m, b_m, w_v, b_v, compute_dtype=compute_dtype)
    return np_z_encoder_apply(x, params, tb=tb, out_dtype=out_dtype)


# --------------------------------------------------------------------------- #
# Demo / self-check
# --------------------------------------------------------------------------- #
if __name__ == "__main__":
    key = jax.random.PRNGKey(0)
    k_x, k_m, k_v = jax.random.split(key, 3)

    r_dim, z_dim = 32, 16   # model_kwargs['r_dim'], model_kwargs['z_dim']

    def init_linear(k, in_dim, out_dim):
        kw, kb = jax.random.split(k)
        bound = 1.0 / (in_dim ** 0.5)
        # Stored pre-transposed: [in_dim, out_dim] so the kernel does x @ W.
        w = jax.random.uniform(kw, (in_dim, out_dim), jnp.float32, -bound, bound)
        b = jax.random.uniform(kb, (out_dim,), jnp.float32, -bound, bound)
        return w, b

    w_m, b_m = init_linear(k_m, r_dim, z_dim)
    w_v, b_v = init_linear(k_v, r_dim, z_dim)

    # --- small-batch f32 path (semantics check against reference) ---
    batch = 8
    x = jax.random.normal(k_x, (batch, r_dim), jnp.float32)
    params_f32 = prepare_zencoder_params(w_m, b_m, w_v, b_v)
    mean, var_temp = np_z_encoder_apply(x, params_f32)
    jax.block_until_ready((mean, var_temp))

    mean_ref = x @ w_m + b_m
    var_ref = x @ w_v + b_v
    assert mean.shape == (batch, z_dim) and var_temp.shape == (batch, z_dim)
    assert jnp.allclose(mean, mean_ref, atol=1e-3, rtol=1e-3)
    assert jnp.allclose(var_temp, var_ref, atol=1e-3, rtol=1e-3)

    # --- larger batch with bf16 compute (halved x/W read traffic), f32 outputs ---
    big_b = 1024
    xb = jax.random.normal(k_x, (big_b, r_dim), jnp.float32)
    params_bf16 = prepare_zencoder_params(w_m, b_m, w_v, b_v, compute_dtype=jnp.bfloat16)
    mb, vb = np_z_encoder_apply(xb, params_bf16, out_dtype=jnp.float32)
    jax.block_until_ready((mb, vb))
    assert mb.shape == (big_b, z_dim) and vb.shape == (big_b, z_dim)
    assert jnp.allclose(mb, xb @ w_m + b_m, atol=3e-2, rtol=3e-2)
    assert jnp.allclose(vb, xb @ w_v + b_v, atol=3e-2, rtol=3e-2)

    # TODO(synk): at toy sizes (B<=64, r=32, z=16) this affine pair should be
    # fused into the adjacent NP encoder kernel; a standalone launch is pure
    # overhead relative to its ~4K useful FLOPs.
    print("KERNEL_OK")
</pallas_src>

<mosaic_0001>
module attributes {stable_mosaic.version = 11 : i64} {
  func.func @_zencoder_kernel(%arg0: i32, %arg1: memref<8x32xf32, #tpu.memory_space<vmem>>, %arg2: memref<32x16xf32, #tpu.memory_space<vmem>>, %arg3: memref<1x16xf32, #tpu.memory_space<vmem>>, %arg4: memref<32x16xf32, #tpu.memory_space<vmem>>, %arg5: memref<1x16xf32, #tpu.memory_space<vmem>>, %arg6: memref<8x16xf32, #tpu.memory_space<vmem>>, %arg7: memref<8x16xf32, #tpu.memory_space<vmem>>) attributes {dimension_semantics = [#tpu.dimension_semantics<parallel>], iteration_bounds = array<i64: 1>, scalar_prefetch = 0 : i64, scratch_operands = 0 : i64, tpu.core_type = #tpu.core_type<tc>, window_params = [{transform_indices = @transform_0, window_bounds = array<i64: 8, 32>}, {pipeline_mode = #tpu.pipeline_mode<synchronous>, transform_indices = @transform_1, window_bounds = array<i64: 32, 16>}, {pipeline_mode = #tpu.pipeline_mode<synchronous>, transform_indices = @transform_2, window_bounds = array<i64: 1, 16>}, {pipeline_mode = #tpu.pipeline_mode<synchronous>, transform_indices = @transform_3, window_bounds = array<i64: 32, 16>}, {pipeline_mode = #tpu.pipeline_mode<synchronous>, transform_indices = @transform_4, window_bounds = array<i64: 1, 16>}, {transform_indices = @transform_5, window_bounds = array<i64: 8, 16>}, {transform_indices = @transform_6, window_bounds = array<i64: 8, 16>}]} {
    %c0 = arith.constant 0 : index
    %c0_0 = arith.constant 0 : index
    %0 = vector.load %arg1[%c0, %c0_0] : memref<8x32xf32, #tpu.memory_space<vmem>>, vector<8x32xf32>
    %c0_1 = arith.constant 0 : index
    %c0_2 = arith.constant 0 : index
    %1 = vector.load %arg2[%c0_1, %c0_2] : memref<32x16xf32, #tpu.memory_space<vmem>>, vector<32x16xf32>
    %cst = arith.constant dense<0.000000e+00> : vector<8x16xf32>
    %2 = tpu.matmul %0, %1, %cst {dimension_numbers = #tpu.dot_dimension_numbers<[1], [0], [0], [1], [0, 0, 1, 1], [], []>} : vector<8x32xf32>, vector<32x16xf32>, vector<8x16xf32> -> vector<8x16xf32>
    %c0_3 = arith.constant 0 : index
    %c0_4 = arith.constant 0 : index
    %3 = vector.load %arg3[%c0_3, %c0_4] : memref<1x16xf32, #tpu.memory_space<vmem>>, vector<1x16xf32>
    %4 = vector.broadcast %3 : vector<1x16xf32> to vector<8x16xf32>
    %5 = arith.addf %2, %4 : vector<8x16xf32>
    %c0_5 = arith.constant 0 : index
    %c0_6 = arith.constant 0 : index
    %6 = vector.load %arg4[%c0_5, %c0_6] : memref<32x16xf32, #tpu.memory_space<vmem>>, vector<32x16xf32>
    %cst_7 = arith.constant dense<0.000000e+00> : vector<8x16xf32>
    %7 = tpu.matmul %0, %6, %cst_7 {dimension_numbers = #tpu.dot_dimension_numbers<[1], [0], [0], [1], [0, 0, 1, 1], [], []>} : vector<8x32xf32>, vector<32x16xf32>, vector<8x16xf32> -> vector<8x16xf32>
    %c0_8 = arith.constant 0 : index
    %c0_9 = arith.constant 0 : index
    %8 = vector.load %arg5[%c0_8, %c0_9] : memref<1x16xf32, #tpu.memory_space<vmem>>, vector<1x16xf32>
    %9 = vector.broadcast %8 : vector<1x16xf32> to vector<8x16xf32>
    %10 = arith.addf %7, %9 : vector<8x16xf32>
    %c0_10 = arith.constant 0 : index
    %c0_11 = arith.constant 0 : index
    %11 = vector.load %arg6[%c0_10, %c0_11] : memref<8x16xf32, #tpu.memory_space<vmem>>, vector<8x16xf32>
    tpu.vector_store %arg6[%c0_10, %c0_11], %5 {strides = array<i32>} : memref<8x16xf32, #tpu.memory_space<vmem>>, vector<8x16xf32>,
    %c0_12 = arith.constant 0 : index
    %c0_13 = arith.constant 0 : index
    %12 = vector.load %arg7[%c0_12, %c0_13] : memref<8x16xf32, #tpu.memory_space<vmem>>, vector<8x16xf32>
    tpu.vector_store %arg7[%c0_12, %c0_13], %10 {strides = array<i32>} : memref<8x16xf32, #tpu.memory_space<vmem>>, vector<8x16xf32>,
    return
  }
  func.func @transform_0(%arg0: i32) -> (i32, i32) {
    %c0_i32 = arith.constant 0 : i32
    %c0_i32_0 = arith.constant 0 : i32
    return %arg0, %c0_i32 : i32, i32
  }
  func.func @transform_1(%arg0: i32) -> (i32, i32) {
    %c0_i32 = arith.constant 0 : i32
    %c0_i32_0 = arith.constant 0 : i32
    %c0_i32_1 = arith.constant 0 : i32
    return %c0_i32, %c0_i32_0 : i32, i32
  }
  func.func @transform_2(%arg0: i32) -> (i32, i32) {
    %c0_i32 = arith.constant 0 : i32
    %c0_i32_0 = arith.constant 0 : i32
    %c0_i32_1 = arith.constant 0 : i32
    return %c0_i32, %c0_i32_0 : i32, i32
  }
  func.func @transform_3(%arg0: i32) -> (i32, i32) {
    %c0_i32 = arith.constant 0 : i32
    %c0_i32_0 = arith.constant 0 : i32
    %c0_i32_1 = arith.constant 0 : i32
    return %c0_i32, %c0_i32_0 : i32, i32
  }
  func.func @transform_4(%arg0: i32) -> (i32, i32) {
    %c0_i32 = arith.constant 0 : i32
    %c0_i32_0 = arith.constant 0 : i32
    %c0_i32_1 = arith.constant 0 : i32
    return %c0_i32, %c0_i32_0 : i32, i32
  }
  func.func @transform_5(%arg0: i32) -> (i32, i32) {
    %c0_i32 = arith.constant 0 : i32
    %c0_i32_0 = arith.constant 0 : i32
    return %arg0, %c0_i32 : i32, i32
  }
  func.func @transform_6(%arg0: i32) -> (i32, i32) {
    %c0_i32 = arith.constant 0 : i32
    %c0_i32_0 = arith.constant 0 : i32
    return %arg0, %c0_i32 : i32, i32
  }
}

</mosaic_0001>

<llo_original>
// kernel: tpu_custom_call.1
$region0: #{tpu_custom_call.1}
  #allocation0 [shape = 'u32[]', space=smem, size = 0x4, offset = 0x4, fixed_abs, tag = 'smem constant byte address 0x4 - core index']
  #allocation1 [shape = 'u32[72,128]{1,0:T(1,128)}', space=vmem, size = 0x9000, scoped, tag = 'internal scratch']
  %s0 = inlined_call_operand.vmem [shape: f32[8,32], index: 0, kind: input, shape index: {}]
  %s1 = inlined_call_operand.vmem [shape: f32[32,16], index: 1, kind: input, shape index: {}]
  %s2 = inlined_call_operand.vmem [shape: f32[1,16], index: 2, kind: input, shape index: {}]
  %s3 = inlined_call_operand.vmem [shape: f32[32,16], index: 3, kind: input, shape index: {}]
  %s4 = inlined_call_operand.vmem [shape: f32[1,16], index: 4, kind: input, shape index: {}]
  %s5 = inlined_call_operand.hbm [shape: f32[8,16], index: 5, kind: output, shape index: {0}]
  %s6 = inlined_call_operand.hbm [shape: f32[8,16], index: 6, kind: output, shape index: {1}]
  %7 = xla_tuple %s5, %s6
  %s8 = sld [smem:[#allocation0]]
  $region38: #{tpu_custom_call.1} parent=0
    _
  %s10 = ssub.s32 1, %s8
  %s11 = scalar_select 0, %s10, %s8
  $region1: #{tpu_custom_call.1} parent=0
    #allocation2 [shape = 'u8[4096]{0}', space=vmem, size = 0x1000, scoped, tag = 'output window, operand 0, single buffered']
    #allocation3 [shape = 's32[1]{0}', space=sflag, size = 0x4, scoped, tag = 'scoped memory for tpu_custom_call.1']
    #allocation4 [shape = 'u8[4096]{0}', space=vmem, size = 0x1000, scoped, tag = 'output window, operand 1, single buffered']
    #allocation5 [shape = 's32[1]{0}', space=sflag, size = 0x4, scoped, tag = 'scoped memory for tpu_custom_call.1']
    %12 = vsyncpa [#allocation3], 0
    %13 = vsyncpa [#allocation5], 0
    // Predicated region
    $region2: #{tpu_custom_call.1} parent=1 // pred_check
      _
    $region3: #{tpu_custom_call.1} parent=1 // pred_check_branch
      %15 = sbr.rel (0) target = $region5
    $region4: #{tpu_custom_call.1} parent=1 // pred_region
      _
    $region5: #{tpu_custom_call.1} parent=1 // pred_fallthru
      _
    // Predicated region
    $region6: #{tpu_custom_call.1} parent=1 // pred_check
      _
    $region7: #{tpu_custom_call.1} parent=1 // pred_check_branch
      %17 = sbr.rel (0) target = $region9
    $region8: #{tpu_custom_call.1} parent=1 // pred_region
      _
    $region9: #{tpu_custom_call.1} parent=1 // pred_fallthru
      _
    // Predicated region
    $region10: #{tpu_custom_call.1} parent=1 // pred_check
      _
    $region11: #{tpu_custom_call.1} parent=1 // pred_check_branch
      %19 = sbr.rel (0) target = $region13
    $region12: #{tpu_custom_call.1} parent=1 // pred_region
      _
    $region13: #{tpu_custom_call.1} parent=1 // pred_fallthru
      _
    // Predicated region
    $region14: #{tpu_custom_call.1} parent=1 // pred_check
      _
    $region15: #{tpu_custom_call.1} parent=1 // pred_check_branch
      %21 = sbr.rel (0) target = $region17
    $region16: #{tpu_custom_call.1} parent=1 // pred_region
      _
    $region17: #{tpu_custom_call.1} parent=1 // pred_fallthru
      _
    // Predicated region
    $region18: #{tpu_custom_call.1} parent=1 // pred_check
      _
    $region19: #{tpu_custom_call.1} parent=1 // pred_check_branch
      %23 = sbr.rel (0) target = $region21
    $region20: #{tpu_custom_call.1} parent=1 // pred_region
      _
    $region21: #{tpu_custom_call.1} parent=1 // pred_fallthru
      _
    %v24 = vld [vmem:[%s0] sm:$0xff]
    %v25 = vld [vmem:[%s1] sm:$0xff]
    %v26 = vld [vmem:[%s1 + $0x8] sm:$0xff]
    %v27 = vld [vmem:[%s1 + $0x10] sm:$0xff]
    %v28 = vld [vmem:[%s1 + $0x18] sm:$0xff]
    %v29 = vld [vmem:[%s2] sm:$0x1]
    %v31 = vperm.slane %v29, 0
    %vm33 = vcmask 261120
    %v35 = vsel %vm33, %v24, 0
    %37 = vmatpush.msra.mxu0 0.0
    %38 = vmatpush.msra.mxu0 0.0
    %39 = vmatpush.msra.mxu0 0.0
    %40 = vmatpush.msra.mxu0 0.0
    %41 = vmatpush.msra.mxu0 0.0
    %42 = vmatpush.msra.mxu0 0.0
    %43 = vmatpush.msra.mxu0 0.0
    %44 = vmatpush.msra.mxu0 0.0
    %45 = vmatpush.msra.mxu0 0.0
    %46 = vmatpush.msra.mxu0 0.0
    %47 = vmatpush.msra.mxu0 0.0
    %48 = vmatpush.msra.mxu0 0.0
    %49 = vmatpush.msra.mxu0 %v28
    %50 = vmatpush.msra.mxu0 %v27
    %51 = vmatpush.msra.mxu0 %v26
    %52 = vmatpush.msra.mxu0 %v25
    %53 = vmatmul.f32.gmra.mxu0 %v35
    %v54 = vpop.f32.mrf.mxu0
    %v55 = vadd.f32 %v31, %v54
    %56 = vdwg.mxu0
    %v57 = vld [vmem:[%s3] sm:$0xff]
    %v58 = vld [vmem:[%s3 + $0x8] sm:$0xff]
    %v59 = vld [vmem:[%s3 + $0x10] sm:$0xff]
    %v60 = vld [vmem:[%s3 + $0x18] sm:$0xff]
    %v61 = vld [vmem:[%s4] sm:$0x1]
    %v63 = vperm.slane %v61, 0
    %65 = vmatpush.msra.mxu0 0.0
    %66 = vmatpush.msra.mxu0 0.0
    %67 = vmatpush.msra.mxu0 0.0
    %68 = vmatpush.msra.mxu0 0.0
    %69 = vmatpush.msra.mxu0 0.0
    %70 = vmatpush.msra.mxu0 0.0
    %71 = vmatpush.msra.mxu0 0.0
    %72 = vmatpush.msra.mxu0 0.0
    %73 = vmatpush.msra.mxu0 0.0
    %74 = vmatpush.msra.mxu0 0.0
    %75 = vmatpush.msra.mxu0 0.0
    %76 = vmatpush.msra.mxu0 0.0
    %77 = vmatpush.msra.mxu0 %v60
    %78 = vmatpush.msra.mxu0 %v59
    %79 = vmatpush.msra.mxu0 %v58
    %80 = vmatpush.msra.mxu0 %v57
    %81 = vmatmul.f32.gmra.mxu0 %v35
    %v82 = vpop.f32.mrf.mxu0
    %v83 = vadd.f32 %v63, %v82
    %84 = vdwg.mxu0
    %vm85 = vcmask 130048
    %86 = vst.msk [vmem:[#allocation2] sm:$0xff] %vm85, %v55
    %87 = vst.msk [vmem:[#allocation4] sm:$0xff] %vm85, %v83
    // Predicated region
    $region22: #{tpu_custom_call.1} parent=1 // pred_check
      _
    $region23: #{tpu_custom_call.1} parent=1 // pred_check_branch
      %89 = sbr.rel (0) target = $region25
    $region24: #{tpu_custom_call.1} parent=1 // pred_region
      %91 = vsyncadd [#allocation3], 0
      %s93 = sshll.u32 [#allocation2], 4
      %s94 = int_to_ptr.vmem [resolvable:$true] %s93
      %s95 = sshll.u32 %s5, 4
      %s96 = int_to_ptr.hbm [resolvable:$true] %s95
      %98 = dma.vmem_to_hbm [thread:$0]  %s94, 128, %s96, [#allocation3]
    $region25: #{tpu_custom_call.1} parent=1 // pred_fallthru
      _
    // Predicated region
    $region26: #{tpu_custom_call.1} parent=1 // pred_check
      _
    $region27: #{tpu_custom_call.1} parent=1 // pred_check_branch
      %100 = sbr.rel (0) target = $region29
    $region28: #{tpu_custom_call.1} parent=1 // pred_region
      %102 = vsyncadd [#allocation5], 0
      %s104 = sshll.u32 [#allocation4], 4
      %s105 = int_to_ptr.vmem [resolvable:$true] %s104
      %s106 = sshll.u32 %s6, 4
      %s107 = int_to_ptr.hbm [resolvable:$true] %s106
      %109 = dma.vmem_to_hbm [thread:$0]  %s105, 128, %s107, [#allocation5]
    $region29: #{tpu_custom_call.1} parent=1 // pred_fallthru
      _
    // Predicated region
    $region30: #{tpu_custom_call.1} parent=1 // pred_check
      _
    $region31: #{tpu_custom_call.1} parent=1 // pred_check_branch
      %111 = sbr.rel (0) target = $region33
    $region32: #{tpu_custom_call.1} parent=1 // pred_region
      %113 = dma.done [#allocation3], 128
    $region33: #{tpu_custom_call.1} parent=1 // pred_fallthru
      _
    // Predicated region
    $region34: #{tpu_custom_call.1} parent=1 // pred_check
      _
    $region35: #{tpu_custom_call.1} parent=1 // pred_check_branch
      %115 = sbr.rel (0) target = $region37
    $region36: #{tpu_custom_call.1} parent=1 // pred_region
      %117 = dma.done [#allocation5], 128
    $region37: #{tpu_custom_call.1} parent=1 // pred_fallthru
      _
    %118 = vsyncpa [#allocation3], 1
    %119 = vsyncpa [#allocation5], 1

</llo_original>
